<compile_context>
chip_gen: v7x
topology: tpu7x:2x2x1
jax: 0.10.0
libtpu: 0.0.40
codegen_flags: <defaults>
</compile_context>

<pallas_src>
import functools

import jax
import jax.numpy as jnp
from jax.experimental import pallas as pl
from jax.experimental.pallas import tpu as pltpu

STATE_SIZE = 32
HIDDEN = 64
ACTION_SIZE = 8
ACTION_STD = 0.1

# lane-padded feature dims (vreg lane width = 128)
HIDDEN_PAD = 128
ACTION_PAD = 128

# default rows per grid step (per-tile VMEM footprint ~1.2 MiB -> safe on
# v5e/v6e (128 MiB) and v7x (64 MiB) with the 32 MiB default scoped limit).
DEFAULT_TILE_B = 1024


def _round_up(x, m):
    return ((x + m - 1) // m) * m


def _policy_kernel(s_ref, eps_ref, w1_ref, b1_ref, w2_ref, b2_ref,
                   w3_ref, b3_ref, a_ref, *, action_std):
    # 3 MXU matmuls (f32 accumulation) + VPU ReLU / bias broadcast.
    h1 = jnp.dot(s_ref[...], w1_ref[...],
                 preferred_element_type=jnp.float32) + b1_ref[...]
    h1 = jnp.maximum(h1, 0.0)
    h2 = jnp.dot(h1, w2_ref[...],
                 preferred_element_type=jnp.float32) + b2_ref[...]
    h2 = jnp.maximum(h2, 0.0)
    loc = jnp.dot(h2, w3_ref[...],
                  preferred_element_type=jnp.float32) + b3_ref[...]
    # Gaussian sampling: a = loc + action_std * eps, eps ~ N(0, 1).
    a_ref[...] = loc + action_std * eps_ref[...]


def init_params(key):
    """Deterministic synthetic policy-net parameters (unpadded shapes)."""
    k1, k2, k3 = jax.random.split(key, 3)
    w1 = jax.random.normal(k1, (STATE_SIZE, HIDDEN), jnp.float32) * 0.1
    b1 = jnp.zeros((1, HIDDEN), jnp.float32)
    w2 = jax.random.normal(k2, (HIDDEN, HIDDEN), jnp.float32) * 0.1
    b2 = jnp.zeros((1, HIDDEN), jnp.float32)
    w3 = jax.random.normal(k3, (HIDDEN, ACTION_SIZE), jnp.float32) * 0.1
    b3 = jnp.zeros((1, ACTION_SIZE), jnp.float32)
    return (w1, b1, w2, b2, w3, b3)


def _pad_params(params):
    """Zero-pad hidden/action feature dims to 128 lanes (math is preserved:
    padded lanes/rows are zero, so they contribute nothing downstream)."""
    w1, b1, w2, b2, w3, b3 = params
    w1p = jnp.pad(w1, ((0, 0), (0, HIDDEN_PAD - HIDDEN)))
    b1p = jnp.pad(b1, ((0, 0), (0, HIDDEN_PAD - HIDDEN)))
    w2p = jnp.pad(w2, ((0, HIDDEN_PAD - HIDDEN), (0, HIDDEN_PAD - HIDDEN)))
    b2p = jnp.pad(b2, ((0, 0), (0, HIDDEN_PAD - HIDDEN)))
    w3p = jnp.pad(w3, ((0, HIDDEN_PAD - HIDDEN), (0, ACTION_PAD - ACTION_SIZE)))
    b3p = jnp.pad(b3, ((0, 0), (0, ACTION_PAD - ACTION_SIZE)))
    return w1p, b1p, w2p, b2p, w3p, b3p


def policy_forward(params, states, key, action_std=ACTION_STD,
                   tile_b=DEFAULT_TILE_B):
    """Equivalent of Policy.forward(states): returns a sampled action batch.

    Mirrors sample_action: reshape to [-1, state_size], compute loc via the
    policy net, sample Normal(loc, action_std); if the input was rank-1,
    return the single action (a[0]).
    """
    squeeze = (states.ndim == 1)
    s = jnp.reshape(states, (-1, STATE_SIZE)).astype(jnp.float32)
    batch = s.shape[0]

    # Batch tiling: pad rows to a multiple of the tile (>= 8 for sublanes).
    tb = min(tile_b, _round_up(batch, 8))
    padded_b = _round_up(batch, tb)
    if padded_b != batch:
        s = jnp.pad(s, ((0, padded_b - batch), (0, 0)))
    n_tiles = padded_b // tb

    w1p, b1p, w2p, b2p, w3p, b3p = _pad_params(params)

    # eps ~ N(0,1), lane-padded so the kernel's output block is lane-dense.
    eps = jax.random.normal(key, (padded_b, ACTION_PAD), jnp.float32)

    kernel = functools.partial(_policy_kernel, action_std=float(action_std))

    weight_bytes = 4 * (w1p.size + b1p.size + w2p.size + b2p.size
                        + w3p.size + b3p.size)
    cost = pl.CostEstimate(
        flops=2 * padded_b * (STATE_SIZE * HIDDEN_PAD
                              + HIDDEN_PAD * HIDDEN_PAD
                              + HIDDEN_PAD * ACTION_PAD),
        transcendentals=0,
        bytes_accessed=4 * padded_b * (STATE_SIZE + 2 * ACTION_PAD)
                       + weight_bytes,
    )

    a_pad = pl.pallas_call(
        kernel,
        out_shape=jax.ShapeDtypeStruct((padded_b, ACTION_PAD), jnp.float32),
        grid=(n_tiles,),
        in_specs=[
            pl.BlockSpec((tb, STATE_SIZE), lambda i: (i, 0)),      # states
            pl.BlockSpec((tb, ACTION_PAD), lambda i: (i, 0)),      # eps
            pl.BlockSpec((STATE_SIZE, HIDDEN_PAD), lambda i: (0, 0)),   # w1
            pl.BlockSpec((1, HIDDEN_PAD), lambda i: (0, 0)),            # b1
            pl.BlockSpec((HIDDEN_PAD, HIDDEN_PAD), lambda i: (0, 0)),   # w2
            pl.BlockSpec((1, HIDDEN_PAD), lambda i: (0, 0)),            # b2
            pl.BlockSpec((HIDDEN_PAD, ACTION_PAD), lambda i: (0, 0)),   # w3
            pl.BlockSpec((1, ACTION_PAD), lambda i: (0, 0)),            # b3
        ],
        out_specs=pl.BlockSpec((tb, ACTION_PAD), lambda i: (i, 0)),
        compiler_params=pltpu.CompilerParams(
            dimension_semantics=("parallel",)),
        cost_estimate=cost,
    )(s, eps, w1p, b1p, w2p, b2p, w3p, b3p)

    a = a_pad[:batch, :ACTION_SIZE]
    if squeeze:
        a = a[0]
    return a


if __name__ == "__main__":
    key = jax.random.PRNGKey(0)
    pkey, skey, nkey1, nkey2 = jax.random.split(key, 4)

    params = init_params(pkey)
    states = jax.random.normal(skey, (2, STATE_SIZE), jnp.float32)  # batch=2

    actions = policy_forward(params, states, key=nkey1)
    jax.block_until_ready(actions)
    assert actions.shape == (2, ACTION_SIZE)
    assert actions.dtype == jnp.float32
    assert bool(jnp.all(jnp.isfinite(actions)))

    # sanity: kernel loc matches a pure-JAX reference (noise removed)
    w1, b1, w2, b2, w3, b3 = params
    h1 = jnp.maximum(states @ w1 + b1, 0.0)
    h2 = jnp.maximum(h1 @ w2 + b2, 0.0)
    loc_ref = h2 @ w3 + b3
    assert bool(jnp.all(jnp.abs(actions - loc_ref) < 6.0 * ACTION_STD + 1e-4))

    # rank-1 input path (n == 1 branch of sample_action)
    single = policy_forward(params, states[0], key=nkey2)
    jax.block_until_ready(single)
    assert single.shape == (ACTION_SIZE,)

    print("KERNEL_OK")
</pallas_src>

<mosaic_0001>
module attributes {stable_mosaic.version = 11 : i64} {
  func.func @_policy_kernel(%arg0: i32, %arg1: memref<8x32xf32, #tpu.memory_space<vmem>>, %arg2: memref<8x128xf32, #tpu.memory_space<vmem>>, %arg3: memref<32x128xf32, #tpu.memory_space<vmem>>, %arg4: memref<1x128xf32, #tpu.memory_space<vmem>>, %arg5: memref<128x128xf32, #tpu.memory_space<vmem>>, %arg6: memref<1x128xf32, #tpu.memory_space<vmem>>, %arg7: memref<128x128xf32, #tpu.memory_space<vmem>>, %arg8: memref<1x128xf32, #tpu.memory_space<vmem>>, %arg9: memref<8x128xf32, #tpu.memory_space<vmem>>) attributes {dimension_semantics = [#tpu.dimension_semantics<parallel>], iteration_bounds = array<i64: 1>, scalar_prefetch = 0 : i64, scratch_operands = 0 : i64, tpu.core_type = #tpu.core_type<tc>, window_params = [{transform_indices = @transform_0, window_bounds = array<i64: 8, 32>}, {transform_indices = @transform_1, window_bounds = array<i64: 8, 128>}, {pipeline_mode = #tpu.pipeline_mode<synchronous>, transform_indices = @transform_2, window_bounds = array<i64: 32, 128>}, {pipeline_mode = #tpu.pipeline_mode<synchronous>, transform_indices = @transform_3, window_bounds = array<i64: 1, 128>}, {pipeline_mode = #tpu.pipeline_mode<synchronous>, transform_indices = @transform_4, window_bounds = array<i64: 128, 128>}, {pipeline_mode = #tpu.pipeline_mode<synchronous>, transform_indices = @transform_5, window_bounds = array<i64: 1, 128>}, {pipeline_mode = #tpu.pipeline_mode<synchronous>, transform_indices = @transform_6, window_bounds = array<i64: 128, 128>}, {pipeline_mode = #tpu.pipeline_mode<synchronous>, transform_indices = @transform_7, window_bounds = array<i64: 1, 128>}, {transform_indices = @transform_8, window_bounds = array<i64: 8, 128>}]} {
    %c0 = arith.constant 0 : index
    %c0_0 = arith.constant 0 : index
    %0 = vector.load %arg1[%c0, %c0_0] : memref<8x32xf32, #tpu.memory_space<vmem>>, vector<8x32xf32>
    %c0_1 = arith.constant 0 : index
    %c0_2 = arith.constant 0 : index
    %1 = vector.load %arg3[%c0_1, %c0_2] : memref<32x128xf32, #tpu.memory_space<vmem>>, vector<32x128xf32>
    %cst = arith.constant dense<0.000000e+00> : vector<8x128xf32>
    %2 = tpu.matmul %0, %1, %cst {dimension_numbers = #tpu.dot_dimension_numbers<[1], [0], [0], [1], [0, 0, 1, 1], [], []>} : vector<8x32xf32>, vector<32x128xf32>, vector<8x128xf32> -> vector<8x128xf32>
    %c0_3 = arith.constant 0 : index
    %c0_4 = arith.constant 0 : index
    %3 = vector.load %arg4[%c0_3, %c0_4] : memref<1x128xf32, #tpu.memory_space<vmem>>, vector<1x128xf32>
    %4 = vector.broadcast %3 : vector<1x128xf32> to vector<8x128xf32>
    %5 = arith.addf %2, %4 : vector<8x128xf32>
    %cst_5 = arith.constant 0.000000e+00 : f32
    %6 = vector.broadcast %cst_5 : f32 to vector<8x128xf32>
    %7 = arith.maximumf %5, %6 : vector<8x128xf32>
    %c0_6 = arith.constant 0 : index
    %c0_7 = arith.constant 0 : index
    %8 = vector.load %arg5[%c0_6, %c0_7] : memref<128x128xf32, #tpu.memory_space<vmem>>, vector<128x128xf32>
    %cst_8 = arith.constant dense<0.000000e+00> : vector<8x128xf32>
    %9 = tpu.matmul %7, %8, %cst_8 {dimension_numbers = #tpu.dot_dimension_numbers<[1], [0], [0], [1], [0, 0, 1, 1], [], []>} : vector<8x128xf32>, vector<128x128xf32>, vector<8x128xf32> -> vector<8x128xf32>
    %c0_9 = arith.constant 0 : index
    %c0_10 = arith.constant 0 : index
    %10 = vector.load %arg6[%c0_9, %c0_10] : memref<1x128xf32, #tpu.memory_space<vmem>>, vector<1x128xf32>
    %11 = vector.broadcast %10 : vector<1x128xf32> to vector<8x128xf32>
    %12 = arith.addf %9, %11 : vector<8x128xf32>
    %cst_11 = arith.constant 0.000000e+00 : f32
    %13 = vector.broadcast %cst_11 : f32 to vector<8x128xf32>
    %14 = arith.maximumf %12, %13 : vector<8x128xf32>
    %c0_12 = arith.constant 0 : index
    %c0_13 = arith.constant 0 : index
    %15 = vector.load %arg7[%c0_12, %c0_13] : memref<128x128xf32, #tpu.memory_space<vmem>>, vector<128x128xf32>
    %cst_14 = arith.constant dense<0.000000e+00> : vector<8x128xf32>
    %16 = tpu.matmul %14, %15, %cst_14 {dimension_numbers = #tpu.dot_dimension_numbers<[1], [0], [0], [1], [0, 0, 1, 1], [], []>} : vector<8x128xf32>, vector<128x128xf32>, vector<8x128xf32> -> vector<8x128xf32>
    %c0_15 = arith.constant 0 : index
    %c0_16 = arith.constant 0 : index
    %17 = vector.load %arg8[%c0_15, %c0_16] : memref<1x128xf32, #tpu.memory_space<vmem>>, vector<1x128xf32>
    %18 = vector.broadcast %17 : vector<1x128xf32> to vector<8x128xf32>
    %19 = arith.addf %16, %18 : vector<8x128xf32>
    %c0_17 = arith.constant 0 : index
    %c0_18 = arith.constant 0 : index
    %20 = vector.load %arg2[%c0_17, %c0_18] : memref<8x128xf32, #tpu.memory_space<vmem>>, vector<8x128xf32>
    %cst_19 = arith.constant 1.000000e-01 : f32
    %21 = vector.broadcast %cst_19 : f32 to vector<8x128xf32>
    %22 = arith.mulf %21, %20 : vector<8x128xf32>
    %23 = arith.addf %19, %22 : vector<8x128xf32>
    %c0_20 = arith.constant 0 : index
    %c0_21 = arith.constant 0 : index
    %24 = vector.load %arg9[%c0_20, %c0_21] : memref<8x128xf32, #tpu.memory_space<vmem>>, vector<8x128xf32>
    tpu.vector_store %arg9[%c0_20, %c0_21], %23 {strides = array<i32>} : memref<8x128xf32, #tpu.memory_space<vmem>>, vector<8x128xf32>,
    return
  }
  func.func @transform_0(%arg0: i32) -> (i32, i32) {
    %c0_i32 = arith.constant 0 : i32
    %c0_i32_0 = arith.constant 0 : i32
    return %arg0, %c0_i32 : i32, i32
  }
  func.func @transform_1(%arg0: i32) -> (i32, i32) {
    %c0_i32 = arith.constant 0 : i32
    %c0_i32_0 = arith.constant 0 : i32
    return %arg0, %c0_i32 : i32, i32
  }
  func.func @transform_2(%arg0: i32) -> (i32, i32) {
    %c0_i32 = arith.constant 0 : i32
    %c0_i32_0 = arith.constant 0 : i32
    %c0_i32_1 = arith.constant 0 : i32
    return %c0_i32, %c0_i32_0 : i32, i32
  }
  func.func @transform_3(%arg0: i32) -> (i32, i32) {
    %c0_i32 = arith.constant 0 : i32
    %c0_i32_0 = arith.constant 0 : i32
    %c0_i32_1 = arith.constant 0 : i32
    return %c0_i32, %c0_i32_0 : i32, i32
  }
  func.func @transform_4(%arg0: i32) -> (i32, i32) {
    %c0_i32 = arith.constant 0 : i32
    %c0_i32_0 = arith.constant 0 : i32
    %c0_i32_1 = arith.constant 0 : i32
    return %c0_i32, %c0_i32_0 : i32, i32
  }
  func.func @transform_5(%arg0: i32) -> (i32, i32) {
    %c0_i32 = arith.constant 0 : i32
    %c0_i32_0 = arith.constant 0 : i32
    %c0_i32_1 = arith.constant 0 : i32
    return %c0_i32, %c0_i32_0 : i32, i32
  }
  func.func @transform_6(%arg0: i32) -> (i32, i32) {
    %c0_i32 = arith.constant 0 : i32
    %c0_i32_0 = arith.constant 0 : i32
    %c0_i32_1 = arith.constant 0 : i32
    return %c0_i32, %c0_i32_0 : i32, i32
  }
  func.func @transform_7(%arg0: i32) -> (i32, i32) {
    %c0_i32 = arith.constant 0 : i32
    %c0_i32_0 = arith.constant 0 : i32
    %c0_i32_1 = arith.constant 0 : i32
    return %c0_i32, %c0_i32_0 : i32, i32
  }
  func.func @transform_8(%arg0: i32) -> (i32, i32) {
    %c0_i32 = arith.constant 0 : i32
    %c0_i32_0 = arith.constant 0 : i32
    return %arg0, %c0_i32 : i32, i32
  }
}

</mosaic_0001>

<llo_original>
// kernel: tpu_custom_call.1
$region0: #{tpu_custom_call.1}
  #allocation0 [shape = 'u32[]', space=smem, size = 0x4, offset = 0x4, fixed_abs, tag = 'smem constant byte address 0x4 - core index']
  #allocation1 [shape = 'u32[144,128]{1,0:T(1,128)}', space=vmem, size = 0x12000, scoped, tag = 'internal scratch']
  %s0 = inlined_call_operand.hbm [shape: f32[8,32], index: 0, kind: input, shape index: {}]
  %s1 = inlined_call_operand.hbm [shape: f32[8,128], index: 1, kind: input, shape index: {}]
  %s2 = inlined_call_operand.hbm [shape: f32[32,128], index: 2, kind: input, shape index: {}]
  %s3 = inlined_call_operand.vmem [shape: f32[1,128], index: 3, kind: input, shape index: {}]
  %s4 = inlined_call_operand.hbm [shape: f32[128,128], index: 4, kind: input, shape index: {}]
  %s5 = inlined_call_operand.vmem [shape: f32[1,128], index: 5, kind: input, shape index: {}]
  %s6 = inlined_call_operand.hbm [shape: f32[128,128], index: 6, kind: input, shape index: {}]
  %s7 = inlined_call_operand.vmem [shape: f32[1,128], index: 7, kind: input, shape index: {}]
  %s8 = inlined_call_operand.hbm [shape: f32[8,128], index: 8, kind: output, shape index: {}]
  %s9 = sld [smem:[#allocation0]]
  $region62: #{tpu_custom_call.1} parent=0
    _
  %s11 = ssub.s32 1, %s9
  %s12 = scalar_select 0, %s11, %s9
  $region1: #{tpu_custom_call.1} parent=0
    #allocation2 [shape = 'u8[4096]{0}', space=vmem, size = 0x1000, scoped, tag = 'input window, operand 0, single buffered']
    #allocation3 [shape = 's32[1]{0}', space=sflag, size = 0x4, scoped, tag = 'scoped memory for tpu_custom_call.1']
    #allocation4 [shape = 's32[1]{0}', space=sflag, size = 0x4, scoped, tag = 'scoped memory for tpu_custom_call.1']
    #allocation5 [shape = 'u8[4096]{0}', space=vmem, size = 0x1000, scoped, tag = 'input window, operand 1, single buffered']
    #allocation6 [shape = 's32[1]{0}', space=sflag, size = 0x4, scoped, tag = 'scoped memory for tpu_custom_call.1']
    #allocation7 [shape = 'u8[16384]{0}', space=vmem, size = 0x4000, scoped, tag = 'input window, operand 2, single buffered']
    #allocation8 [shape = 'u8[65536]{0}', space=vmem, size = 0x10000, scoped, tag = 'input window, operand 4, single buffered']
    #allocation9 [shape = 's32[1]{0}', space=sflag, size = 0x4, scoped, tag = 'scoped memory for tpu_custom_call.1']
    #allocation10 [shape = 'u8[65536]{0}', space=vmem, size = 0x10000, scoped, tag = 'input window, operand 6, single buffered']
    #allocation11 [shape = 'u8[4096]{0}', space=vmem, size = 0x1000, scoped, tag = 'output window, operand 0, single buffered']
    %13 = vsyncpa [#allocation3], 0
    %14 = vsyncpa [#allocation6], 0
    %15 = vsyncpa [#allocation9], 0
    %16 = vsyncpa [#allocation4], 0
    // Predicated region
    $region2: #{tpu_custom_call.1} parent=1 // pred_check
      _
    $region3: #{tpu_custom_call.1} parent=1 // pred_check_branch
      %18 = sbr.rel (0) target = $region5
    $region4: #{tpu_custom_call.1} parent=1 // pred_region
      %s20 = ssub.s32 128, 128
      %21 = vsyncadd [#allocation3], %s20
      %s23 = sshll.u32 [#allocation2], 4
      %s24 = int_to_ptr.vmem [resolvable:$true] %s23
      %26 = dma.hbm_to_vmem [thread:$0]  %s0, 128, %s24, [#allocation3]
    $region5: #{tpu_custom_call.1} parent=1 // pred_fallthru
      _
    // Predicated region
    $region6: #{tpu_custom_call.1} parent=1 // pred_check
      _
    $region7: #{tpu_custom_call.1} parent=1 // pred_check_branch
      %28 = sbr.rel (0) target = $region9
    $region8: #{tpu_custom_call.1} parent=1 // pred_region
      %s30 = ssub.s32 128, 128
      %31 = vsyncadd [#allocation6], %s30
      %s33 = sshll.u32 [#allocation5], 4
      %s34 = int_to_ptr.vmem [resolvable:$true] %s33
      %36 = dma.hbm_to_vmem [thread:$0]  %s1, 128, %s34, [#allocation6]
    $region9: #{tpu_custom_call.1} parent=1 // pred_fallthru
      _
    // Predicated region
    $region10: #{tpu_custom_call.1} parent=1 // pred_check
      _
    $region11: #{tpu_custom_call.1} parent=1 // pred_check_branch
      %38 = sbr.rel (0) target = $region13
    $region12: #{tpu_custom_call.1} parent=1 // pred_region
      %s40 = ssub.s32 512, 512
      %41 = vsyncadd [#allocation6], %s40
      %s42 = sshll.u32 [#allocation7], 4
      %s43 = int_to_ptr.vmem [resolvable:$true] %s42
      %48 = dma.hbm_to_vmem [thread:$0]  %s2, 512, %s43, [#allocation6], 128, 128, 8
    $region13: #{tpu_custom_call.1} parent=1 // pred_fallthru
      _
    // Predicated region
    $region14: #{tpu_custom_call.1} parent=1 // pred_check
      _
    $region15: #{tpu_custom_call.1} parent=1 // pred_check_branch
      %50 = sbr.rel (0) target = $region17
    $region16: #{tpu_custom_call.1} parent=1 // pred_region
      _
    $region17: #{tpu_custom_call.1} parent=1 // pred_fallthru
      _
    // Predicated region
    $region18: #{tpu_custom_call.1} parent=1 // pred_check
      _
    $region19: #{tpu_custom_call.1} parent=1 // pred_check_branch
      %52 = sbr.rel (0) target = $region21
    $region20: #{tpu_custom_call.1} parent=1 // pred_region
      %s54 = ssub.s32 2048, 2048
      %55 = vsyncadd [#allocation9], %s54
      %s56 = sshll.u32 [#allocation8], 4
      %s57 = int_to_ptr.vmem [resolvable:$true] %s56
      %62 = dma.hbm_to_vmem [thread:$0]  %s4, 2048, %s57, [#allocation9], 128, 128, 8
    $region21: #{tpu_custom_call.1} parent=1 // pred_fallthru
      _
    // Predicated region
    $region22: #{tpu_custom_call.1} parent=1 // pred_check
      _
    $region23: #{tpu_custom_call.1} parent=1 // pred_check_branch
      %64 = sbr.rel (0) target = $region25
    $region24: #{tpu_custom_call.1} parent=1 // pred_region
      _
    $region25: #{tpu_custom_call.1} parent=1 // pred_fallthru
      _
    // Predicated region
    $region26: #{tpu_custom_call.1} parent=1 // pred_check
      _
    $region27: #{tpu_custom_call.1} parent=1 // pred_check_branch
      %66 = sbr.rel (0) target = $region29
    $region28: #{tpu_custom_call.1} parent=1 // pred_region
      %s68 = ssub.s32 2048, 2048
      %69 = vsyncadd [#allocation9], %s68
      %s70 = sshll.u32 [#allocation10], 4
      %s71 = int_to_ptr.vmem [resolvable:$true] %s70
      %76 = dma.hbm_to_vmem [thread:$0]  %s6, 2048, %s71, [#allocation9], 128, 128, 8
    $region29: #{tpu_custom_call.1} parent=1 // pred_fallthru
      _
    // Predicated region
    $region30: #{tpu_custom_call.1} parent=1 // pred_check
      _
    $region31: #{tpu_custom_call.1} parent=1 // pred_check_branch
      %78 = sbr.rel (0) target = $region33
    $region32: #{tpu_custom_call.1} parent=1 // pred_region
      _
    $region33: #{tpu_custom_call.1} parent=1 // pred_fallthru
      _
    // Predicated region
    $region34: #{tpu_custom_call.1} parent=1 // pred_check
      _
    $region35: #{tpu_custom_call.1} parent=1 // pred_check_branch
      %80 = sbr.rel (0) target = $region37
    $region36: #{tpu_custom_call.1} parent=1 // pred_region
      %81 = dma.done [#allocation3], 128
    $region37: #{tpu_custom_call.1} parent=1 // pred_fallthru
      _
    // Predicated region
    $region38: #{tpu_custom_call.1} parent=1 // pred_check
      _
    $region39: #{tpu_custom_call.1} parent=1 // pred_check_branch
      %83 = sbr.rel (0) target = $region41
    $region40: #{tpu_custom_call.1} parent=1 // pred_region
      %84 = dma.done [#allocation6], 128
    $region41: #{tpu_custom_call.1} parent=1 // pred_fallthru
      _
    // Predicated region
    $region42: #{tpu_custom_call.1} parent=1 // pred_check
      _
    $region43: #{tpu_custom_call.1} parent=1 // pred_check_branch
      %86 = sbr.rel (0) target = $region45
    $region44: #{tpu_custom_call.1} parent=1 // pred_region
      %87 = dma.done [#allocation6], 512
    $region45: #{tpu_custom_call.1} parent=1 // pred_fallthru
      _
    // Predicated region
    $region46: #{tpu_custom_call.1} parent=1 // pred_check
      _
    $region47: #{tpu_custom_call.1} parent=1 // pred_check_branch
      %89 = sbr.rel (0) target = $region49
    $region48: #{tpu_custom_call.1} parent=1 // pred_region
      %90 = dma.done [#allocation9], 2048
    $region49: #{tpu_custom_call.1} parent=1 // pred_fallthru
      _
    // Predicated region
    $region50: #{tpu_custom_call.1} parent=1 // pred_check
      _
    $region51: #{tpu_custom_call.1} parent=1 // pred_check_branch
      %92 = sbr.rel (0) target = $region53
    $region52: #{tpu_custom_call.1} parent=1 // pred_region
      %93 = dma.done [#allocation9], 2048
    $region53: #{tpu_custom_call.1} parent=1 // pred_fallthru
      _
    %v94 = vld [vmem:[#allocation2] sm:$0xff]
    %v95 = vld [vmem:[#allocation7] sm:$0xff]
    %v96 = vld [vmem:[#allocation7 + $0x8] sm:$0xff]
    %v97 = vld [vmem:[#allocation7 + $0x10] sm:$0xff]
    %v98 = vld [vmem:[#allocation7 + $0x18] sm:$0xff]
    %v99 = vld [vmem:[%s3] sm:$0x1]
    %v101 = vlaneseq
    %v102 = vshrl.u32 %v101, 7
    %v103 = vsub.s32 0, %v102
    %v104 = vrot.slane %v99, %v103
    %vm106 = vcmask 261120
    %v108 = vsel %vm106, %v94, 0
    %110 = vmatprep.subr.mxu0 0.0
    %111 = vmatpush1.msra.mxu0 %v95
    %112 = vmatprep.subr.mxu0 0.0
    %113 = vmatpush1.msra.mxu0 %v96
    %114 = vmatprep.subr.mxu0 0.0
    %115 = vmatpush1.msra.mxu0 %v97
    %116 = vmatprep.subr.mxu0 0.0
    %117 = vmatpush1.msra.mxu0 %v98
    %118 = vmatprep.subr.mxu0 0.0
    %119 = vmatpush1.msra.mxu0 0.0
    %120 = vmatprep.subr.mxu0 0.0
    %121 = vmatpush1.msra.mxu0 0.0
    %122 = vmatprep.subr.mxu0 0.0
    %123 = vmatpush1.msra.mxu0 0.0
    %124 = vmatprep.subr.mxu0 0.0
    %125 = vmatpush1.msra.mxu0 0.0
    %126 = vmatprep.subr.mxu0 0.0
    %127 = vmatpush1.msra.mxu0 0.0
    %128 = vmatprep.subr.mxu0 0.0
    %129 = vmatpush1.msra.mxu0 0.0
    %130 = vmatprep.subr.mxu0 0.0
    %131 = vmatpush1.msra.mxu0 0.0
    %132 = vmatprep.subr.mxu0 0.0
    %133 = vmatpush1.msra.mxu0 0.0
    %134 = vmatprep.subr.mxu0 0.0
    %135 = vmatpush1.msra.mxu0 0.0
    %136 = vmatprep.subr.mxu0 0.0
    %137 = vmatpush1.msra.mxu0 0.0
    %138 = vmatprep.subr.mxu0 0.0
    %139 = vmatpush1.msra.mxu0 0.0
    %140 = vmatprep.subr.mxu0 0.0
    %141 = vmatpush1.msra.mxu0 0.0
    %142 = vmatprep.subr.mxu0 0.0
    %143 = vmatpush1.msra.mxu0 0.0
    %144 = vmatprep.subr.mxu0 0.0
    %145 = vmatpush1.msra.mxu0 0.0
    %146 = vmatprep.subr.mxu0 0.0
    %147 = vmatpush1.msra.mxu0 0.0
    %148 = vmatprep.subr.mxu0 0.0
    %149 = vmatpush1.msra.mxu0 0.0
    %150 = vmatprep.subr.mxu0 0.0
    %151 = vmatpush1.msra.mxu0 0.0
    %152 = vmatprep.subr.mxu0 0.0
    %153 = vmatpush1.msra.mxu0 0.0
    %154 = vmatprep.subr.mxu0 0.0
    %155 = vmatpush1.msra.mxu0 0.0
    %156 = vmatprep.subr.mxu0 0.0
    %157 = vmatpush1.msra.mxu0 0.0
    %158 = vmatprep.subr.mxu0 0.0
    %159 = vmatpush1.msra.mxu0 0.0
    %160 = vmatprep.subr.mxu0 0.0
    %161 = vmatpush1.msra.mxu0 0.0
    %162 = vmatprep.subr.mxu0 0.0
    %163 = vmatpush1.msra.mxu0 0.0
    %164 = vmatprep.subr.mxu0 0.0
    %165 = vmatpush1.msra.mxu0 0.0
    %166 = vmatprep.subr.mxu0 0.0
    %167 = vmatpush1.msra.mxu0 0.0
    %168 = vmatprep.subr.mxu0 0.0
    %169 = vmatpush1.msra.mxu0 0.0
    %170 = vmatprep.subr.mxu0 0.0
    %171 = vmatpush1.msra.mxu0 0.0
    %172 = vmatprep.subr.mxu0 0.0
    %173 = vmatpush1.msra.mxu0 0.0
    %174 = vmatprep.mubr.f32.mxu0 0.0
    %175 = vmatmul.mubr.f32.gmra.mrb[0].mxu0 %v108
    %v176 = vpop.f32.mrb[0].mxu0
    %v177 = vadd.f32 %v104, %v176
    %v178 = vpop.f32.mrb[0].mxu0
    %179 = vdwg.mxu0
    %v180 = vmax.f32 %v177, 0.0
    %v181 = vld [vmem:[#allocation8] sm:$0xff]
    %v182 = vld [vmem:[#allocation8 + $0x8] sm:$0xff]
    %v183 = vld [vmem:[#allocation8 + $0x10] sm:$0xff]
    %v184 = vld [vmem:[#allocation8 + $0x18] sm:$0xff]
    %v185 = vld [vmem:[#allocation8 + $0x20] sm:$0xff]
    %v186 = vld [vmem:[#allocation8 + $0x28] sm:$0xff]
    %v187 = vld [vmem:[#allocation8 + $0x30] sm:$0xff]
    %v188 = vld [vmem:[#allocation8 + $0x38] sm:$0xff]
    %v189 = vld [vmem:[#allocation8 + $0x40] sm:$0xff]
    %v190 = vld [vmem:[#allocation8 + $0x48] sm:$0xff]
    %v191 = vld [vmem:[#allocation8 + $0x50] sm:$0xff]
    %v192 = vld [vmem:[#allocation8 + $0x58] sm:$0xff]
    %v193 = vld [vmem:[#allocation8 + $0x60] sm:$0xff]
    %v194 = vld [vmem:[#allocation8 + $0x68] sm:$0xff]
    %v195 = vld [vmem:[#allocation8 + $0x70] sm:$0xff]
    %v196 = vld [vmem:[#allocation8 + $0x78] sm:$0xff]
    %v197 = vld [vmem:[%s5] sm:$0x1]
    %v199 = vlaneseq
    %v200 = vshrl.u32 %v199, 7
    %v201 = vsub.s32 0, %v200
    %v202 = vrot.slane %v197, %v201
    %204 = vmatprep.subr.mxu0 0.0
    %205 = vmatpush1.msra.mxu0 %v181
    %206 = vmatprep.subr.mxu0 0.0
    %207 = vmatpush1.msra.mxu0 %v182
    %208 = vmatprep.subr.mxu0 0.0
    %209 = vmatpush1.msra.mxu0 %v183
    %210 = vmatprep.subr.mxu0 0.0
    %211 = vmatpush1.msra.mxu0 %v184
    %212 = vmatprep.subr.mxu0 0.0
    %213 = vmatpush1.msra.mxu0 %v185
    %214 = vmatprep.subr.mxu0 0.0
    %215 = vmatpush1.msra.mxu0 %v186
    %216 = vmatprep.subr.mxu0 0.0
    %217 = vmatpush1.msra.mxu0 %v187
    %218 = vmatprep.subr.mxu0 0.0
    %219 = vmatpush1.msra.mxu0 %v188
    %220 = vmatprep.subr.mxu0 0.0
    %221 = vmatpush1.msra.mxu0 %v189
    %222 = vmatprep.subr.mxu0 0.0
    %223 = vmatpush1.msra.mxu0 %v190
    %224 = vmatprep.subr.mxu0 0.0
    %225 = vmatpush1.msra.mxu0 %v191
    %226 = vmatprep.subr.mxu0 0.0
    %227 = vmatpush1.msra.mxu0 %v192
    %228 = vmatprep.subr.mxu0 0.0
    %229 = vmatpush1.msra.mxu0 %v193
    %230 = vmatprep.subr.mxu0 0.0
    %231 = vmatpush1.msra.mxu0 %v194
    %232 = vmatprep.subr.mxu0 0.0
    %233 = vmatpush1.msra.mxu0 %v195
    %234 = vmatprep.subr.mxu0 0.0
    %235 = vmatpush1.msra.mxu0 %v196
    %236 = vmatprep.subr.mxu0 0.0
    %237 = vmatpush1.msra.mxu0 0.0
    %238 = vmatprep.subr.mxu0 0.0
    %239 = vmatpush1.msra.mxu0 0.0
    %240 = vmatprep.subr.mxu0 0.0
    %241 = vmatpush1.msra.mxu0 0.0
    %242 = vmatprep.subr.mxu0 0.0
    %243 = vmatpush1.msra.mxu0 0.0
    %244 = vmatprep.subr.mxu0 0.0
    %245 = vmatpush1.msra.mxu0 0.0
    %246 = vmatprep.subr.mxu0 0.0
    %247 = vmatpush1.msra.mxu0 0.0
    %248 = vmatprep.subr.mxu0 0.0
    %249 = vmatpush1.msra.mxu0 0.0
    %250 = vmatprep.subr.mxu0 0.0
    %251 = vmatpush1.msra.mxu0 0.0
    %252 = vmatprep.subr.mxu0 0.0
    %253 = vmatpush1.msra.mxu0 0.0
    %254 = vmatprep.subr.mxu0 0.0
    %255 = vmatpush1.msra.mxu0 0.0
    %256 = vmatprep.subr.mxu0 0.0
    %257 = vmatpush1.msra.mxu0 0.0
    %258 = vmatprep.subr.mxu0 0.0
    %259 = vmatpush1.msra.mxu0 0.0
    %260 = vmatprep.subr.mxu0 0.0
    %261 = vmatpush1.msra.mxu0 0.0
    %262 = vmatprep.subr.mxu0 0.0
    %263 = vmatpush1.msra.mxu0 0.0
    %264 = vmatprep.subr.mxu0 0.0
    %265 = vmatpush1.msra.mxu0 0.0
    %266 = vmatprep.subr.mxu0 0.0
    %267 = vmatpush1.msra.mxu0 0.0
    %268 = vmatprep.mubr.f32.mxu0 0.0
    %269 = vmatmul.mubr.f32.gmra.mrb[0].mxu0 %v180
    %v270 = vpop.f32.mrb[0].mxu0
    %v271 = vadd.f32 %v202, %v270
    %v272 = vpop.f32.mrb[0].mxu0
    %273 = vdwg.mxu0
    %v274 = vmax.f32 %v271, 0.0
    %v275 = vld [vmem:[#allocation10] sm:$0xff]
    %v276 = vld [vmem:[#allocation10 + $0x8] sm:$0xff]
    %v277 = vld [vmem:[#allocation10 + $0x10] sm:$0xff]
    %v278 = vld [vmem:[#allocation10 + $0x18] sm:$0xff]
    %v279 = vld [vmem:[#allocation10 + $0x20] sm:$0xff]
    %v280 = vld [vmem:[#allocation10 + $0x28] sm:$0xff]
    %v281 = vld [vmem:[#allocation10 + $0x30] sm:$0xff]
    %v282 = vld [vmem:[#allocation10 + $0x38] sm:$0xff]
    %v283 = vld [vmem:[#allocation10 + $0x40] sm:$0xff]
    %v284 = vld [vmem:[#allocation10 + $0x48] sm:$0xff]
    %v285 = vld [vmem:[#allocation10 + $0x50] sm:$0xff]
    %v286 = vld [vmem:[#allocation10 + $0x58] sm:$0xff]
    %v287 = vld [vmem:[#allocation10 + $0x60] sm:$0xff]
    %v288 = vld [vmem:[#allocation10 + $0x68] sm:$0xff]
    %v289 = vld [vmem:[#allocation10 + $0x70] sm:$0xff]
    %v290 = vld [vmem:[#allocation10 + $0x78] sm:$0xff]
    %v291 = vld [vmem:[%s7] sm:$0x1]
    %v293 = vlaneseq
    %v294 = vshrl.u32 %v293, 7
    %v295 = vsub.s32 0, %v294
    %v296 = vrot.slane %v291, %v295
    %298 = vmatprep.subr.mxu0 0.0
    %299 = vmatpush1.msra.mxu0 %v275
    %300 = vmatprep.subr.mxu0 0.0
    %301 = vmatpush1.msra.mxu0 %v276
    %302 = vmatprep.subr.mxu0 0.0
    %303 = vmatpush1.msra.mxu0 %v277
    %304 = vmatprep.subr.mxu0 0.0
    %305 = vmatpush1.msra.mxu0 %v278
    %306 = vmatprep.subr.mxu0 0.0
    %307 = vmatpush1.msra.mxu0 %v279
    %308 = vmatprep.subr.mxu0 0.0
    %309 = vmatpush1.msra.mxu0 %v280
    %310 = vmatprep.subr.mxu0 0.0
    %311 = vmatpush1.msra.mxu0 %v281
    %312 = vmatprep.subr.mxu0 0.0
    %313 = vmatpush1.msra.mxu0 %v282
    %314 = vmatprep.subr.mxu0 0.0
    %315 = vmatpush1.msra.mxu0 %v283
    %316 = vmatprep.subr.mxu0 0.0
    %317 = vmatpush1.msra.mxu0 %v284
    %318 = vmatprep.subr.mxu0 0.0
    %319 = vmatpush1.msra.mxu0 %v285
    %320 = vmatprep.subr.mxu0 0.0
    %321 = vmatpush1.msra.mxu0 %v286
    %322 = vmatprep.subr.mxu0 0.0
    %323 = vmatpush1.msra.mxu0 %v287
    %324 = vmatprep.subr.mxu0 0.0
    %325 = vmatpush1.msra.mxu0 %v288
    %326 = vmatprep.subr.mxu0 0.0
    %327 = vmatpush1.msra.mxu0 %v289
    %328 = vmatprep.subr.mxu0 0.0
    %329 = vmatpush1.msra.mxu0 %v290
    %330 = vmatprep.subr.mxu0 0.0
    %331 = vmatpush1.msra.mxu0 0.0
    %332 = vmatprep.subr.mxu0 0.0
    %333 = vmatpush1.msra.mxu0 0.0
    %334 = vmatprep.subr.mxu0 0.0
    %335 = vmatpush1.msra.mxu0 0.0
    %336 = vmatprep.subr.mxu0 0.0
    %337 = vmatpush1.msra.mxu0 0.0
    %338 = vmatprep.subr.mxu0 0.0
    %339 = vmatpush1.msra.mxu0 0.0
    %340 = vmatprep.subr.mxu0 0.0
    %341 = vmatpush1.msra.mxu0 0.0
    %342 = vmatprep.subr.mxu0 0.0
    %343 = vmatpush1.msra.mxu0 0.0
    %344 = vmatprep.subr.mxu0 0.0
    %345 = vmatpush1.msra.mxu0 0.0
    %346 = vmatprep.subr.mxu0 0.0
    %347 = vmatpush1.msra.mxu0 0.0
    %348 = vmatprep.subr.mxu0 0.0
    %349 = vmatpush1.msra.mxu0 0.0
    %350 = vmatprep.subr.mxu0 0.0
    %351 = vmatpush1.msra.mxu0 0.0
    %352 = vmatprep.subr.mxu0 0.0
    %353 = vmatpush1.msra.mxu0 0.0
    %354 = vmatprep.subr.mxu0 0.0
    %355 = vmatpush1.msra.mxu0 0.0
    %356 = vmatprep.subr.mxu0 0.0
    %357 = vmatpush1.msra.mxu0 0.0
    %358 = vmatprep.subr.mxu0 0.0
    %359 = vmatpush1.msra.mxu0 0.0
    %360 = vmatprep.subr.mxu0 0.0
    %361 = vmatpush1.msra.mxu0 0.0
    %362 = vmatprep.mubr.f32.mxu0 0.0
    %363 = vmatmul.mubr.f32.gmra.mrb[0].mxu0 %v274
    %v364 = vpop.f32.mrb[0].mxu0
    %v365 = vadd.f32 %v296, %v364
    %v366 = vpop.f32.mrb[0].mxu0
    %367 = vdwg.mxu0
    %v368 = vld [vmem:[#allocation5] sm:$0xff]
    %v369 = vmul.f32 %v368, 0.1
    %v370 = vadd.f32 %v365, %v369
    %371 = vst [vmem:[#allocation11] sm:$0xff] %v370
    // Predicated region
    $region54: #{tpu_custom_call.1} parent=1 // pred_check
      _
    $region55: #{tpu_custom_call.1} parent=1 // pred_check_branch
      %373 = sbr.rel (0) target = $region57
    $region56: #{tpu_custom_call.1} parent=1 // pred_region
      %s375 = ssub.s32 128, 128
      %376 = vsyncadd [#allocation4], %s375
      %s378 = sshll.u32 [#allocation11], 4
      %s379 = int_to_ptr.vmem [resolvable:$true] %s378
      %381 = dma.vmem_to_hbm [thread:$0]  %s379, 128, %s8, [#allocation4]
    $region57: #{tpu_custom_call.1} parent=1 // pred_fallthru
      _
    // Predicated region
    $region58: #{tpu_custom_call.1} parent=1 // pred_check
      _
    $region59: #{tpu_custom_call.1} parent=1 // pred_check_branch
      %383 = sbr.rel (0) target = $region61
    $region60: #{tpu_custom_call.1} parent=1 // pred_region
      %384 = dma.done [#allocation4], 128
    $region61: #{tpu_custom_call.1} parent=1 // pred_fallthru
      _
    %385 = vsyncpa [#allocation3], 1
    %386 = vsyncpa [#allocation6], 1
    %387 = vsyncpa [#allocation9], 1
    %388 = vsyncpa [#allocation4], 1

</llo_original>
